<compile_context>
chip_gen: v6e
topology: v6e:2x2x1
jax: 0.10.0
libtpu: 0.0.40
codegen_flags: <defaults>
</compile_context>

<pallas_src>
import functools

import jax
import jax.numpy as jnp
from jax.experimental import pallas as pl
from jax.experimental.pallas import tpu as pltpu


LANE = 128      # TPU lane width (last-dim tile)
SUBLANE = 8     # f32 sublane width (second-to-last-dim tile)


def _round_up(x: int, m: int) -> int:
    return (x + m - 1) // m * m


# --------------------------------------------------------------------------
# Kernel
# --------------------------------------------------------------------------
def dqn_kernel(x_ref,
               w1_ref, b1_ref,
               w2_ref, b2_ref,
               w3_ref, b3_ref,
               w4_ref, b4_ref,
               out_ref):
    """Fused DQN forward on one batch tile: tanh(Linear) x3 + Linear.

    Matmul operands are cast to the weight dtype (bf16 by default) and
    accumulate in f32 on the MXU; bias-add and tanh stay in f32 (VPU/EUP).
    Weights/biases are VMEM-resident across the batch grid (index_map -> (0,0));
    only the x / out tiles stream through the double-buffered pipeline.
    All hidden activations are lane-dense (tb, 128).
    """
    mm_dtype = w1_ref.dtype
    x = x_ref[...]

    h = jnp.dot(x.astype(mm_dtype), w1_ref[...],
                preferred_element_type=jnp.float32) + b1_ref[...]
    h = jnp.tanh(h)

    h = jnp.dot(h.astype(mm_dtype), w2_ref[...],
                preferred_element_type=jnp.float32) + b2_ref[...]
    h = jnp.tanh(h)

    h = jnp.dot(h.astype(mm_dtype), w3_ref[...],
                preferred_element_type=jnp.float32) + b3_ref[...]
    h = jnp.tanh(h)

    out = jnp.dot(h.astype(mm_dtype), w4_ref[...],
                  preferred_element_type=jnp.float32) + b4_ref[...]

    # Lane-dense (tb, 128) zero-padded block; wrapper slices real columns.
    out_ref[...] = out.astype(out_ref.dtype)


# --------------------------------------------------------------------------
# Parameter preparation (done ONCE, not per forward call)
# --------------------------------------------------------------------------
def prepare_params(params, *, matmul_dtype=jnp.bfloat16):
    """Pad every layer to a lane-dense 128 width and pre-cast weights.

    Padding is numerically exact: padded weight columns/rows and bias entries
    are zero, so padded hidden activations are tanh(0) = 0 and contribute
    nothing downstream.  Biases stay f32 (bias-add runs on the VPU in f32).

    Returns (weight_args, n_actions) where weight_args is the flat tuple
    (w1, b1, ..., w4, b4) fed to the kernel.
    """
    n_actions = int(params["w4"].shape[1])

    def pad_w(w, rows, cols):
        r, c = w.shape
        return jnp.pad(w, ((0, rows - r), (0, cols - c))).astype(matmul_dtype)

    def pad_b(b, cols):
        return jnp.pad(b, ((0, 0), (0, cols - b.shape[1]))).astype(jnp.float32)

    in_features = int(params["w1"].shape[0])
    h1 = _round_up(int(params["w1"].shape[1]), LANE)   # 128
    h2 = _round_up(int(params["w2"].shape[1]), LANE)   # 64  -> 128
    h3 = _round_up(int(params["w3"].shape[1]), LANE)   # 32  -> 128
    h4 = _round_up(n_actions, LANE)                    # 4   -> 128

    weight_args = (
        pad_w(params["w1"], in_features, h1), pad_b(params["b1"], h1),
        pad_w(params["w2"], h1, h2),          pad_b(params["b2"], h2),
        pad_w(params["w3"], h2, h3),          pad_b(params["b3"], h3),
        pad_w(params["w4"], h3, h4),          pad_b(params["b4"], h4),
    )
    return weight_args, n_actions


# --------------------------------------------------------------------------
# Forward wrapper
# --------------------------------------------------------------------------
@functools.partial(jax.jit, static_argnames=("n_actions", "block_batch"))
def _dqn_forward_padded(x, weight_args, *, n_actions, block_batch):
    batch, in_features = x.shape
    n_out_pad = weight_args[-1].shape[1]

    # --- batch tiling -------------------------------------------------------
    # Keep the grid >= 2 steps when the batch allows it, so the "parallel"
    # batch axis actually shards across both TensorCores on v7x, while still
    # using big tiles (default 2048 rows) to amortize per-step overhead.
    padded0 = _round_up(batch, SUBLANE)
    tb = min(block_batch, _round_up(max(padded0 // 2, SUBLANE), SUBLANE))
    tb = max(tb, SUBLANE)
    padded_batch = _round_up(batch, tb)
    if padded_batch != batch:
        x = jnp.pad(x, ((0, padded_batch - batch), (0, 0)))

    grid = (padded_batch // tb,)

    def tile_map(i):          # x / out tiles stream over the batch grid
        return (i, 0)

    def resident_map(i):      # weights & biases stay pinned in VMEM
        return (0, 0)

    weight_specs = [pl.BlockSpec(w.shape, resident_map) for w in weight_args]

    # --- cost estimate (derived from actual padded shapes) ------------------
    ws = [weight_args[0], weight_args[2], weight_args[4], weight_args[6]]
    flops = 2 * padded_batch * sum(int(w.shape[0]) * int(w.shape[1]) for w in ws)
    transcendentals = padded_batch * sum(int(w.shape[1]) for w in ws[:3])
    weight_bytes = sum(int(a.size) * a.dtype.itemsize for a in weight_args)
    bytes_accessed = (padded_batch * in_features * x.dtype.itemsize
                      + weight_bytes
                      + padded_batch * n_out_pad * 4)

    # --- explicit VMEM budget (tile blocks double-buffered + temporaries) ---
    block_bytes = (2 * tb * in_features * x.dtype.itemsize   # x, 2 buffers
                   + 2 * tb * n_out_pad * 4                  # out, 2 buffers
                   + 3 * tb * LANE * 4)                      # h1/h2/h3 temps
    vmem_limit = min(_round_up(2 * (block_bytes + weight_bytes), 1 << 20)
                     + (4 << 20),
                     64 << 20)

    out_padded = pl.pallas_call(
        dqn_kernel,
        out_shape=jax.ShapeDtypeStruct((padded_batch, n_out_pad), jnp.float32),
        grid=grid,
        in_specs=[pl.BlockSpec((tb, in_features), tile_map)] + weight_specs,
        out_specs=pl.BlockSpec((tb, n_out_pad), tile_map),
        compiler_params=pltpu.CompilerParams(
            dimension_semantics=("parallel",),
            vmem_limit_bytes=int(vmem_limit)),
        cost_estimate=pl.CostEstimate(
            flops=flops,
            transcendentals=transcendentals,
            bytes_accessed=bytes_accessed),
    )(x, *weight_args)

    return out_padded[:batch, :n_actions]


def dqn_forward(x, prepared, *, block_batch=2048):
    """Fused Pallas DQN forward.

    x: (batch, in_features) float32.
    prepared: output of prepare_params(params) — padded, pre-cast weights.
    block_batch: max batch tile size (rows per grid step).
    """
    weight_args, n_actions = prepared
    return _dqn_forward_padded(x, weight_args,
                               n_actions=n_actions, block_batch=block_batch)


# --------------------------------------------------------------------------
# Init + reference
# --------------------------------------------------------------------------
def init_params(key, input_features, action_space):
    """Deterministic init mirroring PyTorch nn.Linear default:
    U(-1/sqrt(fan_in), 1/sqrt(fan_in)) for both weights and biases."""
    dims = [(input_features, 128), (128, 64), (64, 32), (32, action_space)]
    params = {}
    for i, (fan_in, fan_out) in enumerate(dims, start=1):
        key, kw, kb = jax.random.split(key, 3)
        bound = 1.0 / jnp.sqrt(jnp.float32(fan_in))
        params[f"w{i}"] = jax.random.uniform(
            kw, (fan_in, fan_out), jnp.float32, minval=-bound, maxval=bound)
        params[f"b{i}"] = jax.random.uniform(
            kb, (1, fan_out), jnp.float32, minval=-bound, maxval=bound)
    return params


def reference_forward(x, params):
    """Plain-JAX f32 reference for correctness check."""
    h = jnp.tanh(x @ params["w1"] + params["b1"])
    h = jnp.tanh(h @ params["w2"] + params["b2"])
    h = jnp.tanh(h @ params["w3"] + params["b3"])
    return h @ params["w4"] + params["b4"]


if __name__ == "__main__":
    key = jax.random.PRNGKey(0)

    # Small synthetic env: observation dim 8 (LunarLander-like),
    # 4 discrete actions.
    input_features = 8
    action_space = 4

    key, kx, kp = jax.random.split(key, 3)
    params = init_params(kp, input_features, action_space)
    prepared = prepare_params(params)            # pad + bf16 cast, done once

    # bf16 matmul operands => compare against the f32 reference with a
    # correspondingly relaxed tolerance (values are O(1), tanh-bounded).
    TOL = dict(atol=3e-2, rtol=3e-2)

    # 1) Tiny online-action batch (spec-consistent small shapes).
    x_small = jax.random.normal(kx, (2, input_features), jnp.float32)
    out_small = jax.block_until_ready(dqn_forward(x_small, prepared))
    ref_small = reference_forward(x_small, params)
    assert out_small.shape == (2, action_space)
    assert jnp.allclose(out_small, ref_small, **TOL), \
        "small-batch mismatch vs reference"

    # 2) Replay-batch sized run exercising the multi-tile batch grid:
    #    tb is clamped to padded_batch/2 = 128 rows -> grid=(2,), so both
    #    TensorCores are used on v7x while weights stay VMEM-resident.
    key, kb = jax.random.split(key)
    x_big = jax.random.normal(kb, (256, input_features), jnp.float32)
    out_big = jax.block_until_ready(dqn_forward(x_big, prepared))
    ref_big = reference_forward(x_big, params)
    assert out_big.shape == (256, action_space)
    assert jnp.allclose(out_big, ref_big, **TOL), \
        "large-batch mismatch vs reference"

    print("KERNEL_OK")
</pallas_src>

<mosaic_0001>
module attributes {stable_mosaic.version = 11 : i64} {
  func.func @dqn_kernel(%arg0: i32, %arg1: memref<8x8xf32, #tpu.memory_space<vmem>>, %arg2: memref<8x128xbf16, #tpu.memory_space<vmem>>, %arg3: memref<1x128xf32, #tpu.memory_space<vmem>>, %arg4: memref<128x128xbf16, #tpu.memory_space<vmem>>, %arg5: memref<1x128xf32, #tpu.memory_space<vmem>>, %arg6: memref<128x128xbf16, #tpu.memory_space<vmem>>, %arg7: memref<1x128xf32, #tpu.memory_space<vmem>>, %arg8: memref<128x128xbf16, #tpu.memory_space<vmem>>, %arg9: memref<1x128xf32, #tpu.memory_space<vmem>>, %arg10: memref<8x128xf32, #tpu.memory_space<vmem>>) attributes {dimension_semantics = [#tpu.dimension_semantics<parallel>], iteration_bounds = array<i64: 1>, scalar_prefetch = 0 : i64, scratch_operands = 0 : i64, tpu.core_type = #tpu.core_type<tc>, window_params = [{transform_indices = @transform_0, window_bounds = array<i64: 8, 8>}, {pipeline_mode = #tpu.pipeline_mode<synchronous>, transform_indices = @transform_1, window_bounds = array<i64: 8, 128>}, {pipeline_mode = #tpu.pipeline_mode<synchronous>, transform_indices = @transform_2, window_bounds = array<i64: 1, 128>}, {pipeline_mode = #tpu.pipeline_mode<synchronous>, transform_indices = @transform_3, window_bounds = array<i64: 128, 128>}, {pipeline_mode = #tpu.pipeline_mode<synchronous>, transform_indices = @transform_4, window_bounds = array<i64: 1, 128>}, {pipeline_mode = #tpu.pipeline_mode<synchronous>, transform_indices = @transform_5, window_bounds = array<i64: 128, 128>}, {pipeline_mode = #tpu.pipeline_mode<synchronous>, transform_indices = @transform_6, window_bounds = array<i64: 1, 128>}, {pipeline_mode = #tpu.pipeline_mode<synchronous>, transform_indices = @transform_7, window_bounds = array<i64: 128, 128>}, {pipeline_mode = #tpu.pipeline_mode<synchronous>, transform_indices = @transform_8, window_bounds = array<i64: 1, 128>}, {transform_indices = @transform_9, window_bounds = array<i64: 8, 128>}]} {
    %c0 = arith.constant 0 : index
    %c0_0 = arith.constant 0 : index
    %0 = vector.load %arg1[%c0, %c0_0] : memref<8x8xf32, #tpu.memory_space<vmem>>, vector<8x8xf32>
    %1 = arith.truncf %0 : vector<8x8xf32> to vector<8x8xbf16>
    %c0_1 = arith.constant 0 : index
    %c0_2 = arith.constant 0 : index
    %2 = vector.load %arg2[%c0_1, %c0_2] : memref<8x128xbf16, #tpu.memory_space<vmem>>, vector<8x128xbf16>
    %cst = arith.constant dense<0.000000e+00> : vector<8x128xf32>
    %3 = tpu.matmul %1, %2, %cst {dimension_numbers = #tpu.dot_dimension_numbers<[1], [0], [0], [1], [0, 0, 1, 1], [], []>} : vector<8x8xbf16>, vector<8x128xbf16>, vector<8x128xf32> -> vector<8x128xf32>
    %c0_3 = arith.constant 0 : index
    %c0_4 = arith.constant 0 : index
    %4 = vector.load %arg3[%c0_3, %c0_4] : memref<1x128xf32, #tpu.memory_space<vmem>>, vector<1x128xf32>
    %5 = vector.broadcast %4 : vector<1x128xf32> to vector<8x128xf32>
    %6 = arith.addf %3, %5 : vector<8x128xf32>
    %7 = math.tanh %6 : vector<8x128xf32>
    %8 = arith.truncf %7 : vector<8x128xf32> to vector<8x128xbf16>
    %c0_5 = arith.constant 0 : index
    %c0_6 = arith.constant 0 : index
    %9 = vector.load %arg4[%c0_5, %c0_6] : memref<128x128xbf16, #tpu.memory_space<vmem>>, vector<128x128xbf16>
    %cst_7 = arith.constant dense<0.000000e+00> : vector<8x128xf32>
    %10 = tpu.matmul %8, %9, %cst_7 {dimension_numbers = #tpu.dot_dimension_numbers<[1], [0], [0], [1], [0, 0, 1, 1], [], []>} : vector<8x128xbf16>, vector<128x128xbf16>, vector<8x128xf32> -> vector<8x128xf32>
    %c0_8 = arith.constant 0 : index
    %c0_9 = arith.constant 0 : index
    %11 = vector.load %arg5[%c0_8, %c0_9] : memref<1x128xf32, #tpu.memory_space<vmem>>, vector<1x128xf32>
    %12 = vector.broadcast %11 : vector<1x128xf32> to vector<8x128xf32>
    %13 = arith.addf %10, %12 : vector<8x128xf32>
    %14 = math.tanh %13 : vector<8x128xf32>
    %15 = arith.truncf %14 : vector<8x128xf32> to vector<8x128xbf16>
    %c0_10 = arith.constant 0 : index
    %c0_11 = arith.constant 0 : index
    %16 = vector.load %arg6[%c0_10, %c0_11] : memref<128x128xbf16, #tpu.memory_space<vmem>>, vector<128x128xbf16>
    %cst_12 = arith.constant dense<0.000000e+00> : vector<8x128xf32>
    %17 = tpu.matmul %15, %16, %cst_12 {dimension_numbers = #tpu.dot_dimension_numbers<[1], [0], [0], [1], [0, 0, 1, 1], [], []>} : vector<8x128xbf16>, vector<128x128xbf16>, vector<8x128xf32> -> vector<8x128xf32>
    %c0_13 = arith.constant 0 : index
    %c0_14 = arith.constant 0 : index
    %18 = vector.load %arg7[%c0_13, %c0_14] : memref<1x128xf32, #tpu.memory_space<vmem>>, vector<1x128xf32>
    %19 = vector.broadcast %18 : vector<1x128xf32> to vector<8x128xf32>
    %20 = arith.addf %17, %19 : vector<8x128xf32>
    %21 = math.tanh %20 : vector<8x128xf32>
    %22 = arith.truncf %21 : vector<8x128xf32> to vector<8x128xbf16>
    %c0_15 = arith.constant 0 : index
    %c0_16 = arith.constant 0 : index
    %23 = vector.load %arg8[%c0_15, %c0_16] : memref<128x128xbf16, #tpu.memory_space<vmem>>, vector<128x128xbf16>
    %cst_17 = arith.constant dense<0.000000e+00> : vector<8x128xf32>
    %24 = tpu.matmul %22, %23, %cst_17 {dimension_numbers = #tpu.dot_dimension_numbers<[1], [0], [0], [1], [0, 0, 1, 1], [], []>} : vector<8x128xbf16>, vector<128x128xbf16>, vector<8x128xf32> -> vector<8x128xf32>
    %c0_18 = arith.constant 0 : index
    %c0_19 = arith.constant 0 : index
    %25 = vector.load %arg9[%c0_18, %c0_19] : memref<1x128xf32, #tpu.memory_space<vmem>>, vector<1x128xf32>
    %26 = vector.broadcast %25 : vector<1x128xf32> to vector<8x128xf32>
    %27 = arith.addf %24, %26 : vector<8x128xf32>
    %c0_20 = arith.constant 0 : index
    %c0_21 = arith.constant 0 : index
    %28 = vector.load %arg10[%c0_20, %c0_21] : memref<8x128xf32, #tpu.memory_space<vmem>>, vector<8x128xf32>
    tpu.vector_store %arg10[%c0_20, %c0_21], %27 {strides = array<i32>} : memref<8x128xf32, #tpu.memory_space<vmem>>, vector<8x128xf32>,
    return
  }
  func.func @transform_0(%arg0: i32) -> (i32, i32) {
    %c0_i32 = arith.constant 0 : i32
    %c0_i32_0 = arith.constant 0 : i32
    return %arg0, %c0_i32 : i32, i32
  }
  func.func @transform_1(%arg0: i32) -> (i32, i32) {
    %c0_i32 = arith.constant 0 : i32
    %c0_i32_0 = arith.constant 0 : i32
    %c0_i32_1 = arith.constant 0 : i32
    return %c0_i32, %c0_i32_0 : i32, i32
  }
  func.func @transform_2(%arg0: i32) -> (i32, i32) {
    %c0_i32 = arith.constant 0 : i32
    %c0_i32_0 = arith.constant 0 : i32
    %c0_i32_1 = arith.constant 0 : i32
    return %c0_i32, %c0_i32_0 : i32, i32
  }
  func.func @transform_3(%arg0: i32) -> (i32, i32) {
    %c0_i32 = arith.constant 0 : i32
    %c0_i32_0 = arith.constant 0 : i32
    %c0_i32_1 = arith.constant 0 : i32
    return %c0_i32, %c0_i32_0 : i32, i32
  }
  func.func @transform_4(%arg0: i32) -> (i32, i32) {
    %c0_i32 = arith.constant 0 : i32
    %c0_i32_0 = arith.constant 0 : i32
    %c0_i32_1 = arith.constant 0 : i32
    return %c0_i32, %c0_i32_0 : i32, i32
  }
  func.func @transform_5(%arg0: i32) -> (i32, i32) {
    %c0_i32 = arith.constant 0 : i32
    %c0_i32_0 = arith.constant 0 : i32
    %c0_i32_1 = arith.constant 0 : i32
    return %c0_i32, %c0_i32_0 : i32, i32
  }
  func.func @transform_6(%arg0: i32) -> (i32, i32) {
    %c0_i32 = arith.constant 0 : i32
    %c0_i32_0 = arith.constant 0 : i32
    %c0_i32_1 = arith.constant 0 : i32
    return %c0_i32, %c0_i32_0 : i32, i32
  }
  func.func @transform_7(%arg0: i32) -> (i32, i32) {
    %c0_i32 = arith.constant 0 : i32
    %c0_i32_0 = arith.constant 0 : i32
    %c0_i32_1 = arith.constant 0 : i32
    return %c0_i32, %c0_i32_0 : i32, i32
  }
  func.func @transform_8(%arg0: i32) -> (i32, i32) {
    %c0_i32 = arith.constant 0 : i32
    %c0_i32_0 = arith.constant 0 : i32
    %c0_i32_1 = arith.constant 0 : i32
    return %c0_i32, %c0_i32_0 : i32, i32
  }
  func.func @transform_9(%arg0: i32) -> (i32, i32) {
    %c0_i32 = arith.constant 0 : i32
    %c0_i32_0 = arith.constant 0 : i32
    return %arg0, %c0_i32 : i32, i32
  }
}

</mosaic_0001>

<llo_original>
// kernel: _dqn_forward_padded.1
$region0: #{_dqn_forward_padded.1}
  #allocation0 [shape = 'u32[]', space=smem, size = 0x4, offset = 0x4, fixed_abs, tag = 'smem constant byte address 0x4 - core index']
  #allocation1 [shape = 'u32[144,128]{1,0:T(1,128)}', space=vmem, size = 0x12000, scoped, tag = 'internal scratch']
  %s0 = inlined_call_operand.vmem [shape: f32[8,8], index: 0, kind: input, shape index: {}]
  %s1 = inlined_call_operand.vmem [shape: bf16[8,128], index: 1, kind: input, shape index: {}]
  %s2 = inlined_call_operand.vmem [shape: f32[1,128], index: 2, kind: input, shape index: {}]
  %s3 = inlined_call_operand.hbm [shape: bf16[128,128], index: 3, kind: input, shape index: {}]
  %s4 = inlined_call_operand.vmem [shape: f32[1,128], index: 4, kind: input, shape index: {}]
  %s5 = inlined_call_operand.hbm [shape: bf16[128,128], index: 5, kind: input, shape index: {}]
  %s6 = inlined_call_operand.vmem [shape: f32[1,128], index: 6, kind: input, shape index: {}]
  %s7 = inlined_call_operand.hbm [shape: bf16[128,128], index: 7, kind: input, shape index: {}]
  %s8 = inlined_call_operand.vmem [shape: f32[1,128], index: 8, kind: input, shape index: {}]
  %s9 = inlined_call_operand.vmem [shape: f32[8,128], index: 9, kind: output, shape index: {}]
  %s10 = sld [smem:[#allocation0]]
  $region58: #{_dqn_forward_padded.1} parent=0
    _
  %s12 = ssub.s32 1, %s10
  %s13 = scalar_select 0, %s12, %s10
  $region1: #{_dqn_forward_padded.1} parent=0
    #allocation2 [shape = 'u8[32768]{0}', space=vmem, size = 0x8000, scoped, tag = 'input window, operand 3, single buffered']
    #allocation3 [shape = 's32[1]{0}', space=sflag, size = 0x4, scoped, tag = 'scoped memory for _dqn_forward_padded.1']
    #allocation4 [shape = 'u8[32768]{0}', space=vmem, size = 0x8000, scoped, tag = 'input window, operand 5, single buffered']
    #allocation5 [shape = 's32[1]{0}', space=sflag, size = 0x4, scoped, tag = 'scoped memory for _dqn_forward_padded.1']
    #allocation6 [shape = 'u8[32768]{0}', space=vmem, size = 0x8000, scoped, tag = 'input window, operand 7, single buffered']
    %14 = vsyncpa [#allocation3], 0
    %15 = vsyncpa [#allocation5], 0
    // Predicated region
    $region2: #{_dqn_forward_padded.1} parent=1 // pred_check
      _
    $region3: #{_dqn_forward_padded.1} parent=1 // pred_check_branch
      %17 = sbr.rel (0) target = $region5
    $region4: #{_dqn_forward_padded.1} parent=1 // pred_region
      _
    $region5: #{_dqn_forward_padded.1} parent=1 // pred_fallthru
      _
    // Predicated region
    $region6: #{_dqn_forward_padded.1} parent=1 // pred_check
      _
    $region7: #{_dqn_forward_padded.1} parent=1 // pred_check_branch
      %19 = sbr.rel (0) target = $region9
    $region8: #{_dqn_forward_padded.1} parent=1 // pred_region
      _
    $region9: #{_dqn_forward_padded.1} parent=1 // pred_fallthru
      _
    // Predicated region
    $region10: #{_dqn_forward_padded.1} parent=1 // pred_check
      _
    $region11: #{_dqn_forward_padded.1} parent=1 // pred_check_branch
      %21 = sbr.rel (0) target = $region13
    $region12: #{_dqn_forward_padded.1} parent=1 // pred_region
      _
    $region13: #{_dqn_forward_padded.1} parent=1 // pred_fallthru
      _
    // Predicated region
    $region14: #{_dqn_forward_padded.1} parent=1 // pred_check
      _
    $region15: #{_dqn_forward_padded.1} parent=1 // pred_check_branch
      %23 = sbr.rel (0) target = $region17
    $region16: #{_dqn_forward_padded.1} parent=1 // pred_region
      %s25 = ssub.s32 1024, 1024
      %26 = vsyncadd [#allocation3], %s25
      %s27 = sshll.u32 [#allocation2], 4
      %s28 = int_to_ptr.vmem [resolvable:$true] %s27
      %33 = dma.hbm_to_vmem [thread:$0]  %s3, 1024, %s28, [#allocation3], 64, 64, 4
    $region17: #{_dqn_forward_padded.1} parent=1 // pred_fallthru
      _
    // Predicated region
    $region18: #{_dqn_forward_padded.1} parent=1 // pred_check
      _
    $region19: #{_dqn_forward_padded.1} parent=1 // pred_check_branch
      %35 = sbr.rel (0) target = $region21
    $region20: #{_dqn_forward_padded.1} parent=1 // pred_region
      _
    $region21: #{_dqn_forward_padded.1} parent=1 // pred_fallthru
      _
    // Predicated region
    $region22: #{_dqn_forward_padded.1} parent=1 // pred_check
      _
    $region23: #{_dqn_forward_padded.1} parent=1 // pred_check_branch
      %37 = sbr.rel (0) target = $region25
    $region24: #{_dqn_forward_padded.1} parent=1 // pred_region
      %s39 = ssub.s32 1024, 1024
      %40 = vsyncadd [#allocation5], %s39
      %s41 = sshll.u32 [#allocation4], 4
      %s42 = int_to_ptr.vmem [resolvable:$true] %s41
      %47 = dma.hbm_to_vmem [thread:$0]  %s5, 1024, %s42, [#allocation5], 64, 64, 4
    $region25: #{_dqn_forward_padded.1} parent=1 // pred_fallthru
      _
    // Predicated region
    $region26: #{_dqn_forward_padded.1} parent=1 // pred_check
      _
    $region27: #{_dqn_forward_padded.1} parent=1 // pred_check_branch
      %49 = sbr.rel (0) target = $region29
    $region28: #{_dqn_forward_padded.1} parent=1 // pred_region
      _
    $region29: #{_dqn_forward_padded.1} parent=1 // pred_fallthru
      _
    // Predicated region
    $region30: #{_dqn_forward_padded.1} parent=1 // pred_check
      _
    $region31: #{_dqn_forward_padded.1} parent=1 // pred_check_branch
      %51 = sbr.rel (0) target = $region33
    $region32: #{_dqn_forward_padded.1} parent=1 // pred_region
      %s53 = ssub.s32 1024, 1024
      %54 = vsyncadd [#allocation5], %s53
      %s55 = sshll.u32 [#allocation6], 4
      %s56 = int_to_ptr.vmem [resolvable:$true] %s55
      %61 = dma.hbm_to_vmem [thread:$0]  %s7, 1024, %s56, [#allocation5], 64, 64, 4
    $region33: #{_dqn_forward_padded.1} parent=1 // pred_fallthru
      _
    // Predicated region
    $region34: #{_dqn_forward_padded.1} parent=1 // pred_check
      _
    $region35: #{_dqn_forward_padded.1} parent=1 // pred_check_branch
      %63 = sbr.rel (0) target = $region37
    $region36: #{_dqn_forward_padded.1} parent=1 // pred_region
      _
    $region37: #{_dqn_forward_padded.1} parent=1 // pred_fallthru
      _
    // Predicated region
    $region38: #{_dqn_forward_padded.1} parent=1 // pred_check
      _
    $region39: #{_dqn_forward_padded.1} parent=1 // pred_check_branch
      %65 = sbr.rel (0) target = $region41
    $region40: #{_dqn_forward_padded.1} parent=1 // pred_region
      %66 = dma.done [#allocation3], 1024
    $region41: #{_dqn_forward_padded.1} parent=1 // pred_fallthru
      _
    // Predicated region
    $region42: #{_dqn_forward_padded.1} parent=1 // pred_check
      _
    $region43: #{_dqn_forward_padded.1} parent=1 // pred_check_branch
      %68 = sbr.rel (0) target = $region45
    $region44: #{_dqn_forward_padded.1} parent=1 // pred_region
      %69 = dma.done [#allocation5], 1024
    $region45: #{_dqn_forward_padded.1} parent=1 // pred_fallthru
      _
    // Predicated region
    $region46: #{_dqn_forward_padded.1} parent=1 // pred_check
      _
    $region47: #{_dqn_forward_padded.1} parent=1 // pred_check_branch
      %71 = sbr.rel (0) target = $region49
    $region48: #{_dqn_forward_padded.1} parent=1 // pred_region
      %72 = dma.done [#allocation5], 1024
    $region49: #{_dqn_forward_padded.1} parent=1 // pred_fallthru
      _
    %v74 = vld [vmem:[%s0] sm:$0xff]
    %v75 = vpack.c.bf16 %v74, %v74
    %v76 = vld [vmem:[%s1] sm:$0xf]
    %v77 = vld [vmem:[%s2] sm:$0x1]
    %v79 = vlaneseq
    %v80 = vshrl.u32 %v79, 7
    %v81 = vsub.s32 0, %v80
    %v82 = vrot.slane %v77, %v81
    %vm84 = vcmask 64512
    %v86 = vsel %vm84, %v75, 0
    %vm88 = vcmask 1043456
    %v90 = vsel %vm88, %v76, 0
    %92 = vmatprep.subr.bf16.mxu0 0
    %93 = vmatpush1.bf16.msra.mxu0 0
    %94 = vmatprep.subr.bf16.mxu0 0
    %95 = vmatpush1.bf16.msra.mxu0 0
    %96 = vmatprep.subr.bf16.mxu0 0
    %97 = vmatpush1.bf16.msra.mxu0 0
    %98 = vmatprep.subr.bf16.mxu0 0
    %99 = vmatpush1.bf16.msra.mxu0 0
    %100 = vmatprep.subr.bf16.mxu0 0
    %101 = vmatpush1.bf16.msra.mxu0 0
    %102 = vmatprep.subr.bf16.mxu0 0
    %103 = vmatpush1.bf16.msra.mxu0 0
    %104 = vmatprep.subr.bf16.mxu0 0
    %105 = vmatpush1.bf16.msra.mxu0 0
    %106 = vmatprep.subr.bf16.mxu0 0
    %107 = vmatpush1.bf16.msra.mxu0 %v90
    %108 = vmatprep.subr.bf16.mxu0 0
    %109 = vmatpush2.bf16.msra.mxu0 0
    %110 = vmatprep.subr.bf16.mxu0 0
    %111 = vmatpush2.bf16.msra.mxu0 0
    %112 = vmatprep.subr.bf16.mxu0 0
    %113 = vmatpush2.bf16.msra.mxu0 0
    %114 = vmatprep.subr.bf16.mxu0 0
    %115 = vmatpush2.bf16.msra.mxu0 0
    %116 = vmatprep.subr.bf16.mxu0 0
    %117 = vmatpush2.bf16.msra.mxu0 0
    %118 = vmatprep.subr.bf16.mxu0 0
    %119 = vmatpush2.bf16.msra.mxu0 0
    %120 = vmatprep.subr.bf16.mxu0 0
    %121 = vmatpush2.bf16.msra.mxu0 0
    %122 = vmatprep.subr.bf16.mxu0 0
    %123 = vmatpush2.bf16.msra.mxu0 0
    %124 = vmatprep.mubr.bf16.mxu0 0
    %125 = vmatmul.mubr.bf16.gmra.mxu0 %v86
    %v126 = vpop.f32.mrf.mxu0
    %v127 = vadd.f32 %v82, %v126
    %v128 = vpop.f32.mrf.mxu0
    %v129 = vpop.f32.mrf.mxu0
    %v130 = vpop.f32.mrf.mxu0
    %131 = vdwg.mxu0
    %v132 = vtanh.pop %v127
    %v133 = vpack.c.bf16 %v132, %v132
    %v134 = vld [vmem:[#allocation2] sm:$0xf]
    %v135 = vld [vmem:[#allocation2 + $0x4] sm:$0xf]
    %v136 = vld [vmem:[#allocation2 + $0x8] sm:$0xf]
    %v137 = vld [vmem:[#allocation2 + $0xc] sm:$0xf]
    %v138 = vld [vmem:[#allocation2 + $0x10] sm:$0xf]
    %v139 = vld [vmem:[#allocation2 + $0x14] sm:$0xf]
    %v140 = vld [vmem:[#allocation2 + $0x18] sm:$0xf]
    %v141 = vld [vmem:[#allocation2 + $0x1c] sm:$0xf]
    %v142 = vld [vmem:[#allocation2 + $0x20] sm:$0xf]
    %v143 = vld [vmem:[#allocation2 + $0x24] sm:$0xf]
    %v144 = vld [vmem:[#allocation2 + $0x28] sm:$0xf]
    %v145 = vld [vmem:[#allocation2 + $0x2c] sm:$0xf]
    %v146 = vld [vmem:[#allocation2 + $0x30] sm:$0xf]
    %v147 = vld [vmem:[#allocation2 + $0x34] sm:$0xf]
    %v148 = vld [vmem:[#allocation2 + $0x38] sm:$0xf]
    %v149 = vld [vmem:[#allocation2 + $0x3c] sm:$0xf]
    %v150 = vld [vmem:[%s4] sm:$0x1]
    %v152 = vlaneseq
    %v153 = vshrl.u32 %v152, 7
    %v154 = vsub.s32 0, %v153
    %v155 = vrot.slane %v150, %v154
    %v173 = vunpack.c.l.b16 %v134
    %v174 = vunpack.c.l.b16 %v135
    %v175 = vunpack.c.l.b16 %v136
    %v176 = vunpack.c.l.b16 %v137
    %v177 = vunpack.c.l.b16 %v138
    %v178 = vunpack.c.l.b16 %v139
    %v179 = vunpack.c.l.b16 %v140
    %v180 = vunpack.c.l.b16 %v141
    %v181 = vunpack.c.l.b16 %v142
    %v182 = vunpack.c.l.b16 %v143
    %v183 = vunpack.c.l.b16 %v144
    %v184 = vunpack.c.l.b16 %v145
    %v185 = vunpack.c.l.b16 %v146
    %v186 = vunpack.c.l.b16 %v147
    %v187 = vunpack.c.l.b16 %v148
    %v188 = vunpack.c.l.b16 %v149
    %v189 = vpack.c.b16 %v174, %v173
    %v190 = vpack.c.b16 %v176, %v175
    %v191 = vpack.c.b16 %v178, %v177
    %v192 = vpack.c.b16 %v180, %v179
    %v193 = vpack.c.b16 %v182, %v181
    %v194 = vpack.c.b16 %v184, %v183
    %v195 = vpack.c.b16 %v186, %v185
    %v196 = vpack.c.b16 %v188, %v187
    %205 = vmatprep.subr.bf16.mxu0 0
    %206 = vmatpush1.bf16.msra.mxu0 %v196
    %207 = vmatprep.subr.bf16.mxu0 0
    %208 = vmatpush1.bf16.msra.mxu0 %v195
    %209 = vmatprep.subr.bf16.mxu0 0
    %210 = vmatpush1.bf16.msra.mxu0 %v194
    %211 = vmatprep.subr.bf16.mxu0 0
    %212 = vmatpush1.bf16.msra.mxu0 %v193
    %213 = vmatprep.subr.bf16.mxu0 0
    %214 = vmatpush1.bf16.msra.mxu0 %v192
    %215 = vmatprep.subr.bf16.mxu0 0
    %216 = vmatpush1.bf16.msra.mxu0 %v191
    %217 = vmatprep.subr.bf16.mxu0 0
    %218 = vmatpush1.bf16.msra.mxu0 %v190
    %219 = vmatprep.subr.bf16.mxu0 0
    %220 = vmatpush1.bf16.msra.mxu0 %v189
    %221 = vmatprep.subr.bf16.mxu0 0
    %222 = vmatpush2.bf16.msra.mxu0 0
    %223 = vmatprep.subr.bf16.mxu0 0
    %224 = vmatpush2.bf16.msra.mxu0 0
    %225 = vmatprep.subr.bf16.mxu0 0
    %226 = vmatpush2.bf16.msra.mxu0 0
    %227 = vmatprep.subr.bf16.mxu0 0
    %228 = vmatpush2.bf16.msra.mxu0 0
    %229 = vmatprep.subr.bf16.mxu0 0
    %230 = vmatpush2.bf16.msra.mxu0 0
    %231 = vmatprep.subr.bf16.mxu0 0
    %232 = vmatpush2.bf16.msra.mxu0 0
    %233 = vmatprep.subr.bf16.mxu0 0
    %234 = vmatpush2.bf16.msra.mxu0 0
    %235 = vmatprep.subr.bf16.mxu0 0
    %236 = vmatpush2.bf16.msra.mxu0 0
    %237 = vmatprep.mubr.bf16.mxu0 0
    %238 = vmatmul.mubr.bf16.gmra.mxu0 %v133
    %v239 = vpop.f32.mrf.mxu0
    %v240 = vadd.f32 %v155, %v239
    %v241 = vpop.f32.mrf.mxu0
    %v242 = vpop.f32.mrf.mxu0
    %v243 = vpop.f32.mrf.mxu0
    %244 = vdwg.mxu0
    %v245 = vtanh.pop %v240
    %v246 = vpack.c.bf16 %v245, %v245
    %v247 = vld [vmem:[#allocation4] sm:$0xf]
    %v248 = vld [vmem:[#allocation4 + $0x4] sm:$0xf]
    %v249 = vld [vmem:[#allocation4 + $0x8] sm:$0xf]
    %v250 = vld [vmem:[#allocation4 + $0xc] sm:$0xf]
    %v251 = vld [vmem:[#allocation4 + $0x10] sm:$0xf]
    %v252 = vld [vmem:[#allocation4 + $0x14] sm:$0xf]
    %v253 = vld [vmem:[#allocation4 + $0x18] sm:$0xf]
    %v254 = vld [vmem:[#allocation4 + $0x1c] sm:$0xf]
    %v255 = vld [vmem:[#allocation4 + $0x20] sm:$0xf]
    %v256 = vld [vmem:[#allocation4 + $0x24] sm:$0xf]
    %v257 = vld [vmem:[#allocation4 + $0x28] sm:$0xf]
    %v258 = vld [vmem:[#allocation4 + $0x2c] sm:$0xf]
    %v259 = vld [vmem:[#allocation4 + $0x30] sm:$0xf]
    %v260 = vld [vmem:[#allocation4 + $0x34] sm:$0xf]
    %v261 = vld [vmem:[#allocation4 + $0x38] sm:$0xf]
    %v262 = vld [vmem:[#allocation4 + $0x3c] sm:$0xf]
    %v263 = vld [vmem:[%s6] sm:$0x1]
    %v265 = vlaneseq
    %v266 = vshrl.u32 %v265, 7
    %v267 = vsub.s32 0, %v266
    %v268 = vrot.slane %v263, %v267
    %v286 = vunpack.c.l.b16 %v247
    %v287 = vunpack.c.l.b16 %v248
    %v288 = vunpack.c.l.b16 %v249
    %v289 = vunpack.c.l.b16 %v250
    %v290 = vunpack.c.l.b16 %v251
    %v291 = vunpack.c.l.b16 %v252
    %v292 = vunpack.c.l.b16 %v253
    %v293 = vunpack.c.l.b16 %v254
    %v294 = vunpack.c.l.b16 %v255
    %v295 = vunpack.c.l.b16 %v256
    %v296 = vunpack.c.l.b16 %v257
    %v297 = vunpack.c.l.b16 %v258
    %v298 = vunpack.c.l.b16 %v259
    %v299 = vunpack.c.l.b16 %v260
    %v300 = vunpack.c.l.b16 %v261
    %v301 = vunpack.c.l.b16 %v262
    %v302 = vpack.c.b16 %v287, %v286
    %v303 = vpack.c.b16 %v289, %v288
    %v304 = vpack.c.b16 %v291, %v290
    %v305 = vpack.c.b16 %v293, %v292
    %v306 = vpack.c.b16 %v295, %v294
    %v307 = vpack.c.b16 %v297, %v296
    %v308 = vpack.c.b16 %v299, %v298
    %v309 = vpack.c.b16 %v301, %v300
    %318 = vmatprep.subr.bf16.mxu0 0
    %319 = vmatpush1.bf16.msra.mxu0 %v309
    %320 = vmatprep.subr.bf16.mxu0 0
    %321 = vmatpush1.bf16.msra.mxu0 %v308
    %322 = vmatprep.subr.bf16.mxu0 0
    %323 = vmatpush1.bf16.msra.mxu0 %v307
    %324 = vmatprep.subr.bf16.mxu0 0
    %325 = vmatpush1.bf16.msra.mxu0 %v306
    %326 = vmatprep.subr.bf16.mxu0 0
    %327 = vmatpush1.bf16.msra.mxu0 %v305
    %328 = vmatprep.subr.bf16.mxu0 0
    %329 = vmatpush1.bf16.msra.mxu0 %v304
    %330 = vmatprep.subr.bf16.mxu0 0
    %331 = vmatpush1.bf16.msra.mxu0 %v303
    %332 = vmatprep.subr.bf16.mxu0 0
    %333 = vmatpush1.bf16.msra.mxu0 %v302
    %334 = vmatprep.subr.bf16.mxu0 0
    %335 = vmatpush2.bf16.msra.mxu0 0
    %336 = vmatprep.subr.bf16.mxu0 0
    %337 = vmatpush2.bf16.msra.mxu0 0
    %338 = vmatprep.subr.bf16.mxu0 0
    %339 = vmatpush2.bf16.msra.mxu0 0
    %340 = vmatprep.subr.bf16.mxu0 0
    %341 = vmatpush2.bf16.msra.mxu0 0
    %342 = vmatprep.subr.bf16.mxu0 0
    %343 = vmatpush2.bf16.msra.mxu0 0
    %344 = vmatprep.subr.bf16.mxu0 0
    %345 = vmatpush2.bf16.msra.mxu0 0
    %346 = vmatprep.subr.bf16.mxu0 0
    %347 = vmatpush2.bf16.msra.mxu0 0
    %348 = vmatprep.subr.bf16.mxu0 0
    %349 = vmatpush2.bf16.msra.mxu0 0
    %350 = vmatprep.mubr.bf16.mxu0 0
    %351 = vmatmul.mubr.bf16.gmra.mxu0 %v246
    %v352 = vpop.f32.mrf.mxu0
    %v353 = vadd.f32 %v268, %v352
    %v354 = vpop.f32.mrf.mxu0
    %v355 = vpop.f32.mrf.mxu0
    %v356 = vpop.f32.mrf.mxu0
    %357 = vdwg.mxu0
    %v358 = vtanh.pop %v353
    %v359 = vpack.c.bf16 %v358, %v358
    %v360 = vld [vmem:[#allocation6] sm:$0xf]
    %v361 = vld [vmem:[#allocation6 + $0x4] sm:$0xf]
    %v362 = vld [vmem:[#allocation6 + $0x8] sm:$0xf]
    %v363 = vld [vmem:[#allocation6 + $0xc] sm:$0xf]
    %v364 = vld [vmem:[#allocation6 + $0x10] sm:$0xf]
    %v365 = vld [vmem:[#allocation6 + $0x14] sm:$0xf]
    %v366 = vld [vmem:[#allocation6 + $0x18] sm:$0xf]
    %v367 = vld [vmem:[#allocation6 + $0x1c] sm:$0xf]
    %v368 = vld [vmem:[#allocation6 + $0x20] sm:$0xf]
    %v369 = vld [vmem:[#allocation6 + $0x24] sm:$0xf]
    %v370 = vld [vmem:[#allocation6 + $0x28] sm:$0xf]
    %v371 = vld [vmem:[#allocation6 + $0x2c] sm:$0xf]
    %v372 = vld [vmem:[#allocation6 + $0x30] sm:$0xf]
    %v373 = vld [vmem:[#allocation6 + $0x34] sm:$0xf]
    %v374 = vld [vmem:[#allocation6 + $0x38] sm:$0xf]
    %v375 = vld [vmem:[#allocation6 + $0x3c] sm:$0xf]
    %v376 = vld [vmem:[%s8] sm:$0x1]
    %v378 = vlaneseq
    %v379 = vshrl.u32 %v378, 7
    %v380 = vsub.s32 0, %v379
    %v381 = vrot.slane %v376, %v380
    %v399 = vunpack.c.l.b16 %v360
    %v400 = vunpack.c.l.b16 %v361
    %v401 = vunpack.c.l.b16 %v362
    %v402 = vunpack.c.l.b16 %v363
    %v403 = vunpack.c.l.b16 %v364
    %v404 = vunpack.c.l.b16 %v365
    %v405 = vunpack.c.l.b16 %v366
    %v406 = vunpack.c.l.b16 %v367
    %v407 = vunpack.c.l.b16 %v368
    %v408 = vunpack.c.l.b16 %v369
    %v409 = vunpack.c.l.b16 %v370
    %v410 = vunpack.c.l.b16 %v371
    %v411 = vunpack.c.l.b16 %v372
    %v412 = vunpack.c.l.b16 %v373
    %v413 = vunpack.c.l.b16 %v374
    %v414 = vunpack.c.l.b16 %v375
    %v415 = vpack.c.b16 %v400, %v399
    %v416 = vpack.c.b16 %v402, %v401
    %v417 = vpack.c.b16 %v404, %v403
    %v418 = vpack.c.b16 %v406, %v405
    %v419 = vpack.c.b16 %v408, %v407
    %v420 = vpack.c.b16 %v410, %v409
    %v421 = vpack.c.b16 %v412, %v411
    %v422 = vpack.c.b16 %v414, %v413
    %431 = vmatprep.subr.bf16.mxu0 0
    %432 = vmatpush1.bf16.msra.mxu0 %v422
    %433 = vmatprep.subr.bf16.mxu0 0
    %434 = vmatpush1.bf16.msra.mxu0 %v421
    %435 = vmatprep.subr.bf16.mxu0 0
    %436 = vmatpush1.bf16.msra.mxu0 %v420
    %437 = vmatprep.subr.bf16.mxu0 0
    %438 = vmatpush1.bf16.msra.mxu0 %v419
    %439 = vmatprep.subr.bf16.mxu0 0
    %440 = vmatpush1.bf16.msra.mxu0 %v418
    %441 = vmatprep.subr.bf16.mxu0 0
    %442 = vmatpush1.bf16.msra.mxu0 %v417
    %443 = vmatprep.subr.bf16.mxu0 0
    %444 = vmatpush1.bf16.msra.mxu0 %v416
    %445 = vmatprep.subr.bf16.mxu0 0
    %446 = vmatpush1.bf16.msra.mxu0 %v415
    %447 = vmatprep.subr.bf16.mxu0 0
    %448 = vmatpush2.bf16.msra.mxu0 0
    %449 = vmatprep.subr.bf16.mxu0 0
    %450 = vmatpush2.bf16.msra.mxu0 0
    %451 = vmatprep.subr.bf16.mxu0 0
    %452 = vmatpush2.bf16.msra.mxu0 0
    %453 = vmatprep.subr.bf16.mxu0 0
    %454 = vmatpush2.bf16.msra.mxu0 0
    %455 = vmatprep.subr.bf16.mxu0 0
    %456 = vmatpush2.bf16.msra.mxu0 0
    %457 = vmatprep.subr.bf16.mxu0 0
    %458 = vmatpush2.bf16.msra.mxu0 0
    %459 = vmatprep.subr.bf16.mxu0 0
    %460 = vmatpush2.bf16.msra.mxu0 0
    %461 = vmatprep.subr.bf16.mxu0 0
    %462 = vmatpush2.bf16.msra.mxu0 0
    %463 = vmatprep.mubr.bf16.mxu0 0
    %464 = vmatmul.mubr.bf16.gmra.mxu0 %v359
    %v465 = vpop.f32.mrf.mxu0
    %v466 = vadd.f32 %v381, %v465
    %v467 = vpop.f32.mrf.mxu0
    %v468 = vpop.f32.mrf.mxu0
    %v469 = vpop.f32.mrf.mxu0
    %470 = vdwg.mxu0
    %471 = vst [vmem:[%s9] sm:$0xff] %v466
    // Predicated region
    $region50: #{_dqn_forward_padded.1} parent=1 // pred_check
      _
    $region51: #{_dqn_forward_padded.1} parent=1 // pred_check_branch
      %473 = sbr.rel (0) target = $region53
    $region52: #{_dqn_forward_padded.1} parent=1 // pred_region
      _
    $region53: #{_dqn_forward_padded.1} parent=1 // pred_fallthru
      _
    // Predicated region
    $region54: #{_dqn_forward_padded.1} parent=1 // pred_check
      _
    $region55: #{_dqn_forward_padded.1} parent=1 // pred_check_branch
      %475 = sbr.rel (0) target = $region57
    $region56: #{_dqn_forward_padded.1} parent=1 // pred_region
      _
    $region57: #{_dqn_forward_padded.1} parent=1 // pred_fallthru
      _
    %476 = vsyncpa [#allocation3], 1
    %477 = vsyncpa [#allocation5], 1

</llo_original>
